<compile_context>
chip_gen: v5e
topology: v5e:2x2
jax: 0.10.0
libtpu: 0.0.40
codegen_flags: <defaults>
</compile_context>

<pallas_src>
import jax
import jax.numpy as jnp
from jax import lax
from jax.experimental import pallas as pl
from jax.experimental.pallas import tpu as pltpu


def actor_kernel(x_ref, w_ref, out_ref):
    # x_ref:  [4, TB]   features along sublanes, batch along lanes (dense)
    # w_ref:  [128, 8]  packed params, hidden dim along sublanes
    # out_ref:[1, TB]   p1 = P(action == 1), lane-dense
    w = w_ref[...]                                            # [128, 8]

    # ---- Layer 1: h[j, b] = b1[j] + sum_i W1[j, i] * x[i, b] --------------
    # K = 4 -> four unrolled broadcast-FMAs on the VPU (an MXU matmul would
    # waste >96% of the systolic array and isn't needed: compute is not the
    # binding slot here).
    h = w[:, 4:5] + w[:, 0:1] * x_ref[0:1, :]
    h = h + w[:, 1:2] * x_ref[1:2, :]
    h = h + w[:, 2:3] * x_ref[2:3, :]
    h = h + w[:, 3:4] * x_ref[3:4, :]
    h = jnp.maximum(h, 0.0)                                   # ReLU, [128, TB]

    # ---- Layer 2: 2-class softmax == sigmoid of the logit difference -----
    # d[b] = sum_j h[j, b] * (w2[1, j] - w2[0, j]) + (b2[1] - b2[0])
    d = jnp.sum(h * w[:, 5:6], axis=0, keepdims=True)         # [1, TB] (sublane reduce)
    d = d + w[0:1, 6:7]                                       # + b2_diff (scalar splat)

    # sigmoid(d) = 0.5 * (1 + tanh(d / 2)) : single EUP op, no VALU divide.
    out_ref[...] = 0.5 + 0.5 * jnp.tanh(0.5 * d)


def _choose_tile(B, tile_b):
    """Pick the batch-tile width (always a multiple of 128, or the full B)."""
    if B > tile_b:
        return tile_b
    # Batch fits in one tile: if it is big enough, split into 2 grid steps so
    # the "parallel" axis can be sharded across both v7x TensorCores.
    if B >= 1024 and B % 256 == 0:
        return B // 2
    return B


def actor_forward(x, w_all, *, tile_b=65536):
    """x: [B, 4] f32 observations, w_all: [128, 8] packed params -> probs [B, 2]."""
    B = x.shape[0]
    # Layout plumbing (wrapper-side): feature-major activations so the batch
    # dimension is lane-dense inside the kernel.
    xt = jnp.asarray(x, jnp.float32).T                        # [4, B]

    tb = _choose_tile(B, tile_b)
    grid = (pl.cdiv(B, tb),)

    p1 = pl.pallas_call(
        actor_kernel,
        out_shape=jax.ShapeDtypeStruct((1, B), jnp.float32),
        grid=grid,
        in_specs=[
            pl.BlockSpec((4, tb), lambda i: (0, i)),      # activations, tiled over B
            pl.BlockSpec((128, 8), lambda i: (0, 0)),     # packed params, VMEM-resident
        ],
        out_specs=pl.BlockSpec((1, tb), lambda i: (0, i)),    # lane-dense p1
        compiler_params=pltpu.CompilerParams(
            dimension_semantics=("parallel",)),
    )(xt, w_all)[0]                                           # [B]

    # Complement reconstructed outside the kernel (exact, and keeps the kernel
    # output lane-dense).
    return jnp.stack([1.0 - p1, p1], axis=-1)                 # [B, 2]


def pack_params(w1, b1, w2, b2):
    """Pack all Actor params into one [128, 8] f32 matrix (hidden along sublanes).

    Inputs use PyTorch nn.Linear layouts:
      w1: [128, 4] (out, in), b1: [128], w2: [2, 128] (out, in), b2: [2]
    Columns: 0..3 = W1, 4 = b1, 5 = w2[1]-w2[0], 6 = b2[1]-b2[0] (replicated), 7 = 0.
    """
    w2_diff = (w2[1, :] - w2[0, :])[:, None]                        # [128, 1]
    b2_diff = jnp.full((128, 1), b2[1] - b2[0], dtype=jnp.float32)  # [128, 1]
    pad = jnp.zeros((128, 1), dtype=jnp.float32)
    return jnp.concatenate(
        [w1.astype(jnp.float32), b1[:, None].astype(jnp.float32),
         w2_diff.astype(jnp.float32), b2_diff, pad], axis=1)        # [128, 8]


def init_params(key):
    """PyTorch nn.Linear-style init: U[-1/sqrt(fan_in), +1/sqrt(fan_in)]."""
    k1, k2, k3, k4 = jax.random.split(key, 4)
    bound1 = 1.0 / jnp.sqrt(4.0)
    bound2 = 1.0 / jnp.sqrt(128.0)
    w1 = jax.random.uniform(k1, (128, 4), jnp.float32, -bound1, bound1)
    b1 = jax.random.uniform(k2, (128,), jnp.float32, -bound1, bound1)
    w2 = jax.random.uniform(k3, (2, 128), jnp.float32, -bound2, bound2)
    b2 = jax.random.uniform(k4, (2,), jnp.float32, -bound2, bound2)
    return w1, b1, w2, b2


def reference_forward(x, w1, b1, w2, b2):
    hp = lax.Precision.HIGHEST  # keep the reference in true f32 (TPU default is bf16)
    h = jnp.maximum(jnp.dot(x, w1.T, precision=hp) + b1[None, :], 0.0)
    s = jnp.dot(h, w2.T, precision=hp) + b2[None, :]
    return jax.nn.softmax(s, axis=-1)


if __name__ == "__main__":
    key = jax.random.PRNGKey(0)
    pkey, xkey, xkey2, xkey3 = jax.random.split(key, 4)
    w1, b1, w2, b2 = init_params(pkey)
    w_all = pack_params(w1, b1, w2, b2)

    # Small batch of CartPole-like observations: [B, 4]
    x = jax.random.normal(xkey, (8, 4), jnp.float32)
    probs = jax.block_until_ready(actor_forward(x, w_all))
    ref = reference_forward(x, w1, b1, w2, b2)
    assert probs.shape == (8, 2)
    assert float(jnp.max(jnp.abs(probs - ref))) < 1e-4
    assert jnp.allclose(jnp.sum(probs, axis=-1), 1.0, atol=1e-6)

    # Batched path: one tile split in two -> 2 parallel grid steps (megacore).
    x_big = jax.random.normal(xkey2, (4096, 4), jnp.float32)
    probs_big = jax.block_until_ready(actor_forward(x_big, w_all))
    ref_big = reference_forward(x_big, w1, b1, w2, b2)
    assert probs_big.shape == (4096, 2)
    assert float(jnp.max(jnp.abs(probs_big - ref_big))) < 1e-4

    # Ragged last tile: B not a multiple of the tile width (masked edge block).
    x_rag = jax.random.normal(xkey3, (3000, 4), jnp.float32)
    probs_rag = jax.block_until_ready(actor_forward(x_rag, w_all, tile_b=1024))
    ref_rag = reference_forward(x_rag, w1, b1, w2, b2)
    assert probs_rag.shape == (3000, 2)
    assert float(jnp.max(jnp.abs(probs_rag - ref_rag))) < 1e-4

    print("KERNEL_OK")
</pallas_src>

<mosaic_0001>
module attributes {stable_mosaic.version = 11 : i64} {
  func.func @actor_kernel(%arg0: i32, %arg1: memref<4x8xf32, #tpu.memory_space<vmem>>, %arg2: memref<128x8xf32, #tpu.memory_space<vmem>>, %arg3: memref<1x8xf32, #tpu.memory_space<vmem>>) attributes {dimension_semantics = [#tpu.dimension_semantics<parallel>], iteration_bounds = array<i64: 1>, scalar_prefetch = 0 : i64, scratch_operands = 0 : i64, tpu.core_type = #tpu.core_type<tc>, window_params = [{transform_indices = @transform_0, window_bounds = array<i64: 4, 8>}, {pipeline_mode = #tpu.pipeline_mode<synchronous>, transform_indices = @transform_1, window_bounds = array<i64: 128, 8>}, {transform_indices = @transform_2, window_bounds = array<i64: 1, 8>}]} {
    %c0 = arith.constant 0 : index
    %c0_0 = arith.constant 0 : index
    %0 = vector.load %arg2[%c0, %c0_0] : memref<128x8xf32, #tpu.memory_space<vmem>>, vector<128x8xf32>
    %1 = vector.extract_strided_slice %0 {offsets = [0, 4], sizes = [128, 1], strides = [1, 1]} : vector<128x8xf32> to vector<128x1xf32>
    %2 = vector.extract_strided_slice %0 {offsets = [0, 0], sizes = [128, 1], strides = [1, 1]} : vector<128x8xf32> to vector<128x1xf32>
    %c0_1 = arith.constant 0 : index
    %c0_2 = arith.constant 0 : index
    %3 = vector.load %arg1[%c0_1, %c0_2] : memref<4x8xf32, #tpu.memory_space<vmem>>, vector<1x8xf32>
    %4 = vector.broadcast %2 : vector<128x1xf32> to vector<128x8xf32>
    %5 = vector.broadcast %3 : vector<1x8xf32> to vector<128x8xf32>
    %6 = arith.mulf %4, %5 : vector<128x8xf32>
    %7 = vector.broadcast %1 : vector<128x1xf32> to vector<128x8xf32>
    %8 = arith.addf %7, %6 : vector<128x8xf32>
    %9 = vector.extract_strided_slice %0 {offsets = [0, 1], sizes = [128, 1], strides = [1, 1]} : vector<128x8xf32> to vector<128x1xf32>
    %c1 = arith.constant 1 : index
    %c0_3 = arith.constant 0 : index
    %10 = vector.load %arg1[%c1, %c0_3] : memref<4x8xf32, #tpu.memory_space<vmem>>, vector<1x8xf32>
    %11 = vector.broadcast %9 : vector<128x1xf32> to vector<128x8xf32>
    %12 = vector.broadcast %10 : vector<1x8xf32> to vector<128x8xf32>
    %13 = arith.mulf %11, %12 : vector<128x8xf32>
    %14 = arith.addf %8, %13 : vector<128x8xf32>
    %15 = vector.extract_strided_slice %0 {offsets = [0, 2], sizes = [128, 1], strides = [1, 1]} : vector<128x8xf32> to vector<128x1xf32>
    %c2 = arith.constant 2 : index
    %c0_4 = arith.constant 0 : index
    %16 = vector.load %arg1[%c2, %c0_4] : memref<4x8xf32, #tpu.memory_space<vmem>>, vector<1x8xf32>
    %17 = vector.broadcast %15 : vector<128x1xf32> to vector<128x8xf32>
    %18 = vector.broadcast %16 : vector<1x8xf32> to vector<128x8xf32>
    %19 = arith.mulf %17, %18 : vector<128x8xf32>
    %20 = arith.addf %14, %19 : vector<128x8xf32>
    %21 = vector.extract_strided_slice %0 {offsets = [0, 3], sizes = [128, 1], strides = [1, 1]} : vector<128x8xf32> to vector<128x1xf32>
    %c3 = arith.constant 3 : index
    %c0_5 = arith.constant 0 : index
    %22 = vector.load %arg1[%c3, %c0_5] : memref<4x8xf32, #tpu.memory_space<vmem>>, vector<1x8xf32>
    %23 = vector.broadcast %21 : vector<128x1xf32> to vector<128x8xf32>
    %24 = vector.broadcast %22 : vector<1x8xf32> to vector<128x8xf32>
    %25 = arith.mulf %23, %24 : vector<128x8xf32>
    %26 = arith.addf %20, %25 : vector<128x8xf32>
    %cst = arith.constant 0.000000e+00 : f32
    %27 = vector.broadcast %cst : f32 to vector<128x8xf32>
    %28 = arith.maximumf %26, %27 : vector<128x8xf32>
    %29 = vector.extract_strided_slice %0 {offsets = [0, 5], sizes = [128, 1], strides = [1, 1]} : vector<128x8xf32> to vector<128x1xf32>
    %30 = vector.broadcast %29 : vector<128x1xf32> to vector<128x8xf32>
    %31 = arith.mulf %28, %30 : vector<128x8xf32>
    %cst_6 = arith.constant dense<0.000000e+00> : vector<8xf32>
    %32 = vector.multi_reduction <add>, %31, %cst_6 [0] : vector<128x8xf32> to vector<8xf32>
    %33 = vector.shape_cast %32 : vector<8xf32> to vector<1x8xf32>
    %34 = vector.extract_strided_slice %0 {offsets = [0, 6], sizes = [1, 1], strides = [1, 1]} : vector<128x8xf32> to vector<1x1xf32>
    %35 = vector.broadcast %34 : vector<1x1xf32> to vector<1x8xf32>
    %36 = arith.addf %33, %35 : vector<1x8xf32>
    %cst_7 = arith.constant 5.000000e-01 : f32
    %37 = vector.broadcast %cst_7 : f32 to vector<1x8xf32>
    %38 = arith.mulf %37, %36 : vector<1x8xf32>
    %39 = math.tanh %38 : vector<1x8xf32>
    %cst_8 = arith.constant 5.000000e-01 : f32
    %40 = vector.broadcast %cst_8 : f32 to vector<1x8xf32>
    %41 = arith.mulf %40, %39 : vector<1x8xf32>
    %cst_9 = arith.constant 5.000000e-01 : f32
    %42 = vector.broadcast %cst_9 : f32 to vector<1x8xf32>
    %43 = arith.addf %42, %41 : vector<1x8xf32>
    %c0_10 = arith.constant 0 : index
    %c0_11 = arith.constant 0 : index
    %44 = vector.load %arg3[%c0_10, %c0_11] : memref<1x8xf32, #tpu.memory_space<vmem>>, vector<1x8xf32>
    tpu.vector_store %arg3[%c0_10, %c0_11], %43 {strides = array<i32>} : memref<1x8xf32, #tpu.memory_space<vmem>>, vector<1x8xf32>,
    return
  }
  func.func @transform_0(%arg0: i32) -> (i32, i32) {
    %c0_i32 = arith.constant 0 : i32
    %c0_i32_0 = arith.constant 0 : i32
    return %c0_i32, %arg0 : i32, i32
  }
  func.func @transform_1(%arg0: i32) -> (i32, i32) {
    %c0_i32 = arith.constant 0 : i32
    %c0_i32_0 = arith.constant 0 : i32
    %c0_i32_1 = arith.constant 0 : i32
    return %c0_i32, %c0_i32_0 : i32, i32
  }
  func.func @transform_2(%arg0: i32) -> (i32, i32) {
    %c0_i32 = arith.constant 0 : i32
    %c0_i32_0 = arith.constant 0 : i32
    return %c0_i32, %arg0 : i32, i32
  }
}

</mosaic_0001>

<llo_original>
// kernel: tpu_custom_call.1
$region0: #{tpu_custom_call.1}
  #allocation0 [shape = 'u32[]', space=smem, size = 0x4, offset = 0x4, fixed_abs, tag = 'smem constant byte address 0x4 - core index']
  #allocation1 [shape = 'u32[72,128]{1,0:T(1,128)}', space=vmem, size = 0x9000, scoped, tag = 'internal scratch']
  %s0 = inlined_call_operand.vmem [shape: f32[4,8], index: 0, kind: input, shape index: {}]
  %s1 = inlined_call_operand.vmem [shape: f32[128,8], index: 1, kind: input, shape index: {}]
  %s2 = inlined_call_operand.hbm [shape: f32[1,8], index: 2, kind: output, shape index: {}]
  %s3 = sld [smem:[#allocation0]]
  $region18: #{tpu_custom_call.1} parent=0
    _
  %s5 = ssub.s32 1, %s3
  %s6 = scalar_select 0, %s5, %s3
  $region1: #{tpu_custom_call.1} parent=0
    #allocation2 [shape = 'u8[512]{0}', space=vmem, size = 0x400, scoped, tag = 'output window, operand 0, single buffered']
    #allocation3 [shape = 's32[1]{0}', space=sflag, size = 0x4, scoped, tag = 'scoped memory for tpu_custom_call.1']
    %7 = vsyncpa [#allocation3], 0
    // Predicated region
    $region2: #{tpu_custom_call.1} parent=1 // pred_check
      _
    $region3: #{tpu_custom_call.1} parent=1 // pred_check_branch
      %9 = sbr.rel (0) target = $region5
    $region4: #{tpu_custom_call.1} parent=1 // pred_region
      _
    $region5: #{tpu_custom_call.1} parent=1 // pred_fallthru
      _
    // Predicated region
    $region6: #{tpu_custom_call.1} parent=1 // pred_check
      _
    $region7: #{tpu_custom_call.1} parent=1 // pred_check_branch
      %11 = sbr.rel (0) target = $region9
    $region8: #{tpu_custom_call.1} parent=1 // pred_region
      _
    $region9: #{tpu_custom_call.1} parent=1 // pred_fallthru
      _
    %v12 = vld [vmem:[%s1] sm:$0xff]
    %v13 = vld [vmem:[%s1 + $0x8] sm:$0xff]
    %v14 = vld [vmem:[%s1 + $0x10] sm:$0xff]
    %v15 = vld [vmem:[%s1 + $0x18] sm:$0xff]
    %v16 = vld [vmem:[%s1 + $0x20] sm:$0xff]
    %v17 = vld [vmem:[%s1 + $0x28] sm:$0xff]
    %v18 = vld [vmem:[%s1 + $0x30] sm:$0xff]
    %v19 = vld [vmem:[%s1 + $0x38] sm:$0xff]
    %v20 = vld [vmem:[%s1 + $0x40] sm:$0xff]
    %v21 = vld [vmem:[%s1 + $0x48] sm:$0xff]
    %v22 = vld [vmem:[%s1 + $0x50] sm:$0xff]
    %v23 = vld [vmem:[%s1 + $0x58] sm:$0xff]
    %v24 = vld [vmem:[%s1 + $0x60] sm:$0xff]
    %v25 = vld [vmem:[%s1 + $0x68] sm:$0xff]
    %v26 = vld [vmem:[%s1 + $0x70] sm:$0xff]
    %v27 = vld [vmem:[%s1 + $0x78] sm:$0xff]
    %v28 = vld [vmem:[%s0] sm:$0x1]
    %30 = vset.pattern.permute.xlu0 0
    %31 = vperm.xlu0 %30, %v12
    %v32 = vpop.permute.xlu0 %31
    %35 = vset.pattern.permute.xlu0 0
    %36 = vperm.xlu0 %35, %v13
    %v37 = vpop.permute.xlu0 %36
    %40 = vset.pattern.permute.xlu0 0
    %41 = vperm.xlu0 %40, %v14
    %v42 = vpop.permute.xlu0 %41
    %45 = vset.pattern.permute.xlu0 0
    %46 = vperm.xlu0 %45, %v15
    %v47 = vpop.permute.xlu0 %46
    %50 = vset.pattern.permute.xlu0 0
    %51 = vperm.xlu0 %50, %v16
    %v52 = vpop.permute.xlu0 %51
    %55 = vset.pattern.permute.xlu0 0
    %56 = vperm.xlu0 %55, %v17
    %v57 = vpop.permute.xlu0 %56
    %60 = vset.pattern.permute.xlu0 0
    %61 = vperm.xlu0 %60, %v18
    %v62 = vpop.permute.xlu0 %61
    %65 = vset.pattern.permute.xlu0 0
    %66 = vperm.xlu0 %65, %v19
    %v67 = vpop.permute.xlu0 %66
    %70 = vset.pattern.permute.xlu0 0
    %71 = vperm.xlu0 %70, %v20
    %v72 = vpop.permute.xlu0 %71
    %75 = vset.pattern.permute.xlu0 0
    %76 = vperm.xlu0 %75, %v21
    %v77 = vpop.permute.xlu0 %76
    %80 = vset.pattern.permute.xlu0 0
    %81 = vperm.xlu0 %80, %v22
    %v82 = vpop.permute.xlu0 %81
    %85 = vset.pattern.permute.xlu0 0
    %86 = vperm.xlu0 %85, %v23
    %v87 = vpop.permute.xlu0 %86
    %90 = vset.pattern.permute.xlu0 0
    %91 = vperm.xlu0 %90, %v24
    %v92 = vpop.permute.xlu0 %91
    %95 = vset.pattern.permute.xlu0 0
    %96 = vperm.xlu0 %95, %v25
    %v97 = vpop.permute.xlu0 %96
    %100 = vset.pattern.permute.xlu0 0
    %101 = vperm.xlu0 %100, %v26
    %v102 = vpop.permute.xlu0 %101
    %105 = vset.pattern.permute.xlu0 0
    %106 = vperm.xlu0 %105, %v27
    %v107 = vpop.permute.xlu0 %106
    %v109 = vperm.slane %v28, 0
    %v110 = vmul.f32 %v32, %v109
    %v111 = vmul.f32 %v37, %v109
    %v112 = vmul.f32 %v42, %v109
    %v113 = vmul.f32 %v47, %v109
    %v114 = vmul.f32 %v52, %v109
    %v115 = vmul.f32 %v57, %v109
    %v116 = vmul.f32 %v62, %v109
    %v117 = vmul.f32 %v67, %v109
    %v118 = vmul.f32 %v72, %v109
    %v119 = vmul.f32 %v77, %v109
    %v120 = vmul.f32 %v82, %v109
    %v121 = vmul.f32 %v87, %v109
    %v122 = vmul.f32 %v92, %v109
    %v123 = vmul.f32 %v97, %v109
    %v124 = vmul.f32 %v102, %v109
    %v125 = vmul.f32 %v107, %v109
    %126 = vset.pattern.permute.xlu0 4
    %127 = vperm.xlu0 %126, %v12
    %v128 = vpop.permute.xlu0 %127
    %130 = vset.pattern.permute.xlu0 4
    %131 = vperm.xlu0 %130, %v13
    %v132 = vpop.permute.xlu0 %131
    %134 = vset.pattern.permute.xlu0 4
    %135 = vperm.xlu0 %134, %v14
    %v136 = vpop.permute.xlu0 %135
    %138 = vset.pattern.permute.xlu0 4
    %139 = vperm.xlu0 %138, %v15
    %v140 = vpop.permute.xlu0 %139
    %142 = vset.pattern.permute.xlu0 4
    %143 = vperm.xlu0 %142, %v16
    %v144 = vpop.permute.xlu0 %143
    %146 = vset.pattern.permute.xlu0 4
    %147 = vperm.xlu0 %146, %v17
    %v148 = vpop.permute.xlu0 %147
    %150 = vset.pattern.permute.xlu0 4
    %151 = vperm.xlu0 %150, %v18
    %v152 = vpop.permute.xlu0 %151
    %154 = vset.pattern.permute.xlu0 4
    %155 = vperm.xlu0 %154, %v19
    %v156 = vpop.permute.xlu0 %155
    %158 = vset.pattern.permute.xlu0 4
    %159 = vperm.xlu0 %158, %v20
    %v160 = vpop.permute.xlu0 %159
    %162 = vset.pattern.permute.xlu0 4
    %163 = vperm.xlu0 %162, %v21
    %v164 = vpop.permute.xlu0 %163
    %166 = vset.pattern.permute.xlu0 4
    %167 = vperm.xlu0 %166, %v22
    %v168 = vpop.permute.xlu0 %167
    %170 = vset.pattern.permute.xlu0 4
    %171 = vperm.xlu0 %170, %v23
    %v172 = vpop.permute.xlu0 %171
    %174 = vset.pattern.permute.xlu0 4
    %175 = vperm.xlu0 %174, %v24
    %v176 = vpop.permute.xlu0 %175
    %178 = vset.pattern.permute.xlu0 4
    %179 = vperm.xlu0 %178, %v25
    %v180 = vpop.permute.xlu0 %179
    %182 = vset.pattern.permute.xlu0 4
    %183 = vperm.xlu0 %182, %v26
    %v184 = vpop.permute.xlu0 %183
    %186 = vset.pattern.permute.xlu0 4
    %187 = vperm.xlu0 %186, %v27
    %v188 = vpop.permute.xlu0 %187
    %v190 = vadd.f32 %v128, %v110
    %v191 = vadd.f32 %v132, %v111
    %v192 = vadd.f32 %v136, %v112
    %v193 = vadd.f32 %v140, %v113
    %v194 = vadd.f32 %v144, %v114
    %v195 = vadd.f32 %v148, %v115
    %v196 = vadd.f32 %v152, %v116
    %v197 = vadd.f32 %v156, %v117
    %v198 = vadd.f32 %v160, %v118
    %v199 = vadd.f32 %v164, %v119
    %v200 = vadd.f32 %v168, %v120
    %v201 = vadd.f32 %v172, %v121
    %v202 = vadd.f32 %v176, %v122
    %v203 = vadd.f32 %v180, %v123
    %v204 = vadd.f32 %v184, %v124
    %v205 = vadd.f32 %v188, %v125
    %v206 = vld [vmem:[%s0 + $0x1] sm:$0x1]
    %207 = vset.pattern.permute.xlu0 1
    %208 = vperm.xlu0 %207, %v12
    %v209 = vpop.permute.xlu0 %208
    %211 = vset.pattern.permute.xlu0 1
    %212 = vperm.xlu0 %211, %v13
    %v213 = vpop.permute.xlu0 %212
    %215 = vset.pattern.permute.xlu0 1
    %216 = vperm.xlu0 %215, %v14
    %v217 = vpop.permute.xlu0 %216
    %219 = vset.pattern.permute.xlu0 1
    %220 = vperm.xlu0 %219, %v15
    %v221 = vpop.permute.xlu0 %220
    %223 = vset.pattern.permute.xlu0 1
    %224 = vperm.xlu0 %223, %v16
    %v225 = vpop.permute.xlu0 %224
    %227 = vset.pattern.permute.xlu0 1
    %228 = vperm.xlu0 %227, %v17
    %v229 = vpop.permute.xlu0 %228
    %231 = vset.pattern.permute.xlu0 1
    %232 = vperm.xlu0 %231, %v18
    %v233 = vpop.permute.xlu0 %232
    %235 = vset.pattern.permute.xlu0 1
    %236 = vperm.xlu0 %235, %v19
    %v237 = vpop.permute.xlu0 %236
    %239 = vset.pattern.permute.xlu0 1
    %240 = vperm.xlu0 %239, %v20
    %v241 = vpop.permute.xlu0 %240
    %243 = vset.pattern.permute.xlu0 1
    %244 = vperm.xlu0 %243, %v21
    %v245 = vpop.permute.xlu0 %244
    %247 = vset.pattern.permute.xlu0 1
    %248 = vperm.xlu0 %247, %v22
    %v249 = vpop.permute.xlu0 %248
    %251 = vset.pattern.permute.xlu0 1
    %252 = vperm.xlu0 %251, %v23
    %v253 = vpop.permute.xlu0 %252
    %255 = vset.pattern.permute.xlu0 1
    %256 = vperm.xlu0 %255, %v24
    %v257 = vpop.permute.xlu0 %256
    %259 = vset.pattern.permute.xlu0 1
    %260 = vperm.xlu0 %259, %v25
    %v261 = vpop.permute.xlu0 %260
    %263 = vset.pattern.permute.xlu0 1
    %264 = vperm.xlu0 %263, %v26
    %v265 = vpop.permute.xlu0 %264
    %267 = vset.pattern.permute.xlu0 1
    %268 = vperm.xlu0 %267, %v27
    %v269 = vpop.permute.xlu0 %268
    %v271 = vperm.slane %v206, 0
    %v272 = vmul.f32 %v209, %v271
    %v273 = vmul.f32 %v213, %v271
    %v274 = vmul.f32 %v217, %v271
    %v275 = vmul.f32 %v221, %v271
    %v276 = vmul.f32 %v225, %v271
    %v277 = vmul.f32 %v229, %v271
    %v278 = vmul.f32 %v233, %v271
    %v279 = vmul.f32 %v237, %v271
    %v280 = vmul.f32 %v241, %v271
    %v281 = vmul.f32 %v245, %v271
    %v282 = vmul.f32 %v249, %v271
    %v283 = vmul.f32 %v253, %v271
    %v284 = vmul.f32 %v257, %v271
    %v285 = vmul.f32 %v261, %v271
    %v286 = vmul.f32 %v265, %v271
    %v287 = vmul.f32 %v269, %v271
    %v288 = vadd.f32 %v190, %v272
    %v289 = vadd.f32 %v191, %v273
    %v290 = vadd.f32 %v192, %v274
    %v291 = vadd.f32 %v193, %v275
    %v292 = vadd.f32 %v194, %v276
    %v293 = vadd.f32 %v195, %v277
    %v294 = vadd.f32 %v196, %v278
    %v295 = vadd.f32 %v197, %v279
    %v296 = vadd.f32 %v198, %v280
    %v297 = vadd.f32 %v199, %v281
    %v298 = vadd.f32 %v200, %v282
    %v299 = vadd.f32 %v201, %v283
    %v300 = vadd.f32 %v202, %v284
    %v301 = vadd.f32 %v203, %v285
    %v302 = vadd.f32 %v204, %v286
    %v303 = vadd.f32 %v205, %v287
    %v304 = vld [vmem:[%s0 + $0x2] sm:$0x1]
    %305 = vset.pattern.permute.xlu0 2
    %306 = vperm.xlu0 %305, %v12
    %v307 = vpop.permute.xlu0 %306
    %309 = vset.pattern.permute.xlu0 2
    %310 = vperm.xlu0 %309, %v13
    %v311 = vpop.permute.xlu0 %310
    %313 = vset.pattern.permute.xlu0 2
    %314 = vperm.xlu0 %313, %v14
    %v315 = vpop.permute.xlu0 %314
    %317 = vset.pattern.permute.xlu0 2
    %318 = vperm.xlu0 %317, %v15
    %v319 = vpop.permute.xlu0 %318
    %321 = vset.pattern.permute.xlu0 2
    %322 = vperm.xlu0 %321, %v16
    %v323 = vpop.permute.xlu0 %322
    %325 = vset.pattern.permute.xlu0 2
    %326 = vperm.xlu0 %325, %v17
    %v327 = vpop.permute.xlu0 %326
    %329 = vset.pattern.permute.xlu0 2
    %330 = vperm.xlu0 %329, %v18
    %v331 = vpop.permute.xlu0 %330
    %333 = vset.pattern.permute.xlu0 2
    %334 = vperm.xlu0 %333, %v19
    %v335 = vpop.permute.xlu0 %334
    %337 = vset.pattern.permute.xlu0 2
    %338 = vperm.xlu0 %337, %v20
    %v339 = vpop.permute.xlu0 %338
    %341 = vset.pattern.permute.xlu0 2
    %342 = vperm.xlu0 %341, %v21
    %v343 = vpop.permute.xlu0 %342
    %345 = vset.pattern.permute.xlu0 2
    %346 = vperm.xlu0 %345, %v22
    %v347 = vpop.permute.xlu0 %346
    %349 = vset.pattern.permute.xlu0 2
    %350 = vperm.xlu0 %349, %v23
    %v351 = vpop.permute.xlu0 %350
    %353 = vset.pattern.permute.xlu0 2
    %354 = vperm.xlu0 %353, %v24
    %v355 = vpop.permute.xlu0 %354
    %357 = vset.pattern.permute.xlu0 2
    %358 = vperm.xlu0 %357, %v25
    %v359 = vpop.permute.xlu0 %358
    %361 = vset.pattern.permute.xlu0 2
    %362 = vperm.xlu0 %361, %v26
    %v363 = vpop.permute.xlu0 %362
    %365 = vset.pattern.permute.xlu0 2
    %366 = vperm.xlu0 %365, %v27
    %v367 = vpop.permute.xlu0 %366
    %v369 = vperm.slane %v304, 0
    %v370 = vmul.f32 %v307, %v369
    %v371 = vmul.f32 %v311, %v369
    %v372 = vmul.f32 %v315, %v369
    %v373 = vmul.f32 %v319, %v369
    %v374 = vmul.f32 %v323, %v369
    %v375 = vmul.f32 %v327, %v369
    %v376 = vmul.f32 %v331, %v369
    %v377 = vmul.f32 %v335, %v369
    %v378 = vmul.f32 %v339, %v369
    %v379 = vmul.f32 %v343, %v369
    %v380 = vmul.f32 %v347, %v369
    %v381 = vmul.f32 %v351, %v369
    %v382 = vmul.f32 %v355, %v369
    %v383 = vmul.f32 %v359, %v369
    %v384 = vmul.f32 %v363, %v369
    %v385 = vmul.f32 %v367, %v369
    %v386 = vadd.f32 %v288, %v370
    %v387 = vadd.f32 %v289, %v371
    %v388 = vadd.f32 %v290, %v372
    %v389 = vadd.f32 %v291, %v373
    %v390 = vadd.f32 %v292, %v374
    %v391 = vadd.f32 %v293, %v375
    %v392 = vadd.f32 %v294, %v376
    %v393 = vadd.f32 %v295, %v377
    %v394 = vadd.f32 %v296, %v378
    %v395 = vadd.f32 %v297, %v379
    %v396 = vadd.f32 %v298, %v380
    %v397 = vadd.f32 %v299, %v381
    %v398 = vadd.f32 %v300, %v382
    %v399 = vadd.f32 %v301, %v383
    %v400 = vadd.f32 %v302, %v384
    %v401 = vadd.f32 %v303, %v385
    %v402 = vld [vmem:[%s0 + $0x3] sm:$0x1]
    %403 = vset.pattern.permute.xlu0 3
    %404 = vperm.xlu0 %403, %v12
    %v405 = vpop.permute.xlu0 %404
    %407 = vset.pattern.permute.xlu0 3
    %408 = vperm.xlu0 %407, %v13
    %v409 = vpop.permute.xlu0 %408
    %411 = vset.pattern.permute.xlu0 3
    %412 = vperm.xlu0 %411, %v14
    %v413 = vpop.permute.xlu0 %412
    %415 = vset.pattern.permute.xlu0 3
    %416 = vperm.xlu0 %415, %v15
    %v417 = vpop.permute.xlu0 %416
    %419 = vset.pattern.permute.xlu0 3
    %420 = vperm.xlu0 %419, %v16
    %v421 = vpop.permute.xlu0 %420
    %423 = vset.pattern.permute.xlu0 3
    %424 = vperm.xlu0 %423, %v17
    %v425 = vpop.permute.xlu0 %424
    %427 = vset.pattern.permute.xlu0 3
    %428 = vperm.xlu0 %427, %v18
    %v429 = vpop.permute.xlu0 %428
    %431 = vset.pattern.permute.xlu0 3
    %432 = vperm.xlu0 %431, %v19
    %v433 = vpop.permute.xlu0 %432
    %435 = vset.pattern.permute.xlu0 3
    %436 = vperm.xlu0 %435, %v20
    %v437 = vpop.permute.xlu0 %436
    %439 = vset.pattern.permute.xlu0 3
    %440 = vperm.xlu0 %439, %v21
    %v441 = vpop.permute.xlu0 %440
    %443 = vset.pattern.permute.xlu0 3
    %444 = vperm.xlu0 %443, %v22
    %v445 = vpop.permute.xlu0 %444
    %447 = vset.pattern.permute.xlu0 3
    %448 = vperm.xlu0 %447, %v23
    %v449 = vpop.permute.xlu0 %448
    %451 = vset.pattern.permute.xlu0 3
    %452 = vperm.xlu0 %451, %v24
    %v453 = vpop.permute.xlu0 %452
    %455 = vset.pattern.permute.xlu0 3
    %456 = vperm.xlu0 %455, %v25
    %v457 = vpop.permute.xlu0 %456
    %459 = vset.pattern.permute.xlu0 3
    %460 = vperm.xlu0 %459, %v26
    %v461 = vpop.permute.xlu0 %460
    %463 = vset.pattern.permute.xlu0 3
    %464 = vperm.xlu0 %463, %v27
    %v465 = vpop.permute.xlu0 %464
    %v467 = vperm.slane %v402, 0
    %v468 = vmul.f32 %v405, %v467
    %v469 = vmul.f32 %v409, %v467
    %v470 = vmul.f32 %v413, %v467
    %v471 = vmul.f32 %v417, %v467
    %v472 = vmul.f32 %v421, %v467
    %v473 = vmul.f32 %v425, %v467
    %v474 = vmul.f32 %v429, %v467
    %v475 = vmul.f32 %v433, %v467
    %v476 = vmul.f32 %v437, %v467
    %v477 = vmul.f32 %v441, %v467
    %v478 = vmul.f32 %v445, %v467
    %v479 = vmul.f32 %v449, %v467
    %v480 = vmul.f32 %v453, %v467
    %v481 = vmul.f32 %v457, %v467
    %v482 = vmul.f32 %v461, %v467
    %v483 = vmul.f32 %v465, %v467
    %v484 = vadd.f32 %v386, %v468
    %v485 = vadd.f32 %v387, %v469
    %v486 = vadd.f32 %v388, %v470
    %v487 = vadd.f32 %v389, %v471
    %v488 = vadd.f32 %v390, %v472
    %v489 = vadd.f32 %v391, %v473
    %v490 = vadd.f32 %v392, %v474
    %v491 = vadd.f32 %v393, %v475
    %v492 = vadd.f32 %v394, %v476
    %v493 = vadd.f32 %v395, %v477
    %v494 = vadd.f32 %v396, %v478
    %v495 = vadd.f32 %v397, %v479
    %v496 = vadd.f32 %v398, %v480
    %v497 = vadd.f32 %v399, %v481
    %v498 = vadd.f32 %v400, %v482
    %v499 = vadd.f32 %v401, %v483
    %v500 = vmax.f32 %v484, 0.0
    %v501 = vmax.f32 %v485, 0.0
    %v502 = vmax.f32 %v486, 0.0
    %v503 = vmax.f32 %v487, 0.0
    %v504 = vmax.f32 %v488, 0.0
    %v505 = vmax.f32 %v489, 0.0
    %v506 = vmax.f32 %v490, 0.0
    %v507 = vmax.f32 %v491, 0.0
    %v508 = vmax.f32 %v492, 0.0
    %v509 = vmax.f32 %v493, 0.0
    %v510 = vmax.f32 %v494, 0.0
    %v511 = vmax.f32 %v495, 0.0
    %v512 = vmax.f32 %v496, 0.0
    %v513 = vmax.f32 %v497, 0.0
    %v514 = vmax.f32 %v498, 0.0
    %v515 = vmax.f32 %v499, 0.0
    %516 = vset.pattern.permute.xlu0 5
    %517 = vperm.xlu0 %516, %v12
    %v518 = vpop.permute.xlu0 %517
    %520 = vset.pattern.permute.xlu0 5
    %521 = vperm.xlu0 %520, %v13
    %v522 = vpop.permute.xlu0 %521
    %524 = vset.pattern.permute.xlu0 5
    %525 = vperm.xlu0 %524, %v14
    %v526 = vpop.permute.xlu0 %525
    %528 = vset.pattern.permute.xlu0 5
    %529 = vperm.xlu0 %528, %v15
    %v530 = vpop.permute.xlu0 %529
    %532 = vset.pattern.permute.xlu0 5
    %533 = vperm.xlu0 %532, %v16
    %v534 = vpop.permute.xlu0 %533
    %536 = vset.pattern.permute.xlu0 5
    %537 = vperm.xlu0 %536, %v17
    %v538 = vpop.permute.xlu0 %537
    %540 = vset.pattern.permute.xlu0 5
    %541 = vperm.xlu0 %540, %v18
    %v542 = vpop.permute.xlu0 %541
    %544 = vset.pattern.permute.xlu0 5
    %545 = vperm.xlu0 %544, %v19
    %v546 = vpop.permute.xlu0 %545
    %548 = vset.pattern.permute.xlu0 5
    %549 = vperm.xlu0 %548, %v20
    %v550 = vpop.permute.xlu0 %549
    %552 = vset.pattern.permute.xlu0 5
    %553 = vperm.xlu0 %552, %v21
    %v554 = vpop.permute.xlu0 %553
    %556 = vset.pattern.permute.xlu0 5
    %557 = vperm.xlu0 %556, %v22
    %v558 = vpop.permute.xlu0 %557
    %560 = vset.pattern.permute.xlu0 5
    %561 = vperm.xlu0 %560, %v23
    %v562 = vpop.permute.xlu0 %561
    %564 = vset.pattern.permute.xlu0 5
    %565 = vperm.xlu0 %564, %v24
    %v566 = vpop.permute.xlu0 %565
    %568 = vset.pattern.permute.xlu0 5
    %569 = vperm.xlu0 %568, %v25
    %v570 = vpop.permute.xlu0 %569
    %572 = vset.pattern.permute.xlu0 5
    %573 = vperm.xlu0 %572, %v26
    %v574 = vpop.permute.xlu0 %573
    %576 = vset.pattern.permute.xlu0 5
    %577 = vperm.xlu0 %576, %v27
    %v578 = vpop.permute.xlu0 %577
    %v580 = vmul.f32 %v500, %v518
    %v581 = vmul.f32 %v501, %v522
    %v582 = vmul.f32 %v502, %v526
    %v583 = vmul.f32 %v503, %v530
    %v584 = vmul.f32 %v504, %v534
    %v585 = vmul.f32 %v505, %v538
    %v586 = vmul.f32 %v506, %v542
    %v587 = vmul.f32 %v507, %v546
    %v588 = vmul.f32 %v508, %v550
    %v589 = vmul.f32 %v509, %v554
    %v590 = vmul.f32 %v510, %v558
    %v591 = vmul.f32 %v511, %v562
    %v592 = vmul.f32 %v512, %v566
    %v593 = vmul.f32 %v513, %v570
    %v594 = vmul.f32 %v514, %v574
    %v595 = vmul.f32 %v515, %v578
    %vm596 = vcmask 64512
    %v597 = vsel %vm596, %v580, 0.0
    %v598 = vsel %vm596, %v581, 0.0
    %v599 = vadd.f32 %v597, %v598
    %v600 = vsel %vm596, %v582, 0.0
    %v601 = vadd.f32 %v599, %v600
    %v602 = vsel %vm596, %v583, 0.0
    %v603 = vadd.f32 %v601, %v602
    %v604 = vsel %vm596, %v584, 0.0
    %v605 = vadd.f32 %v603, %v604
    %v606 = vsel %vm596, %v585, 0.0
    %v607 = vadd.f32 %v605, %v606
    %v608 = vsel %vm596, %v586, 0.0
    %v609 = vadd.f32 %v607, %v608
    %v610 = vsel %vm596, %v587, 0.0
    %v611 = vadd.f32 %v609, %v610
    %v612 = vsel %vm596, %v588, 0.0
    %v613 = vadd.f32 %v611, %v612
    %v614 = vsel %vm596, %v589, 0.0
    %v615 = vadd.f32 %v613, %v614
    %v616 = vsel %vm596, %v590, 0.0
    %v617 = vadd.f32 %v615, %v616
    %v618 = vsel %vm596, %v591, 0.0
    %v619 = vadd.f32 %v617, %v618
    %v620 = vsel %vm596, %v592, 0.0
    %v621 = vadd.f32 %v619, %v620
    %v622 = vsel %vm596, %v593, 0.0
    %v623 = vadd.f32 %v621, %v622
    %v624 = vsel %vm596, %v594, 0.0
    %v625 = vadd.f32 %v623, %v624
    %v626 = vsel %vm596, %v595, 0.0
    %v627 = vadd.f32 %v625, %v626
    %v628 = vrot.slane %v627, 4
    %v629 = vadd.f32 %v627, %v628
    %v630 = vrot.slane %v629, 2
    %v631 = vadd.f32 %v629, %v630
    %v632 = vrot.slane %v631, 1
    %v633 = vadd.f32 %v631, %v632
    %634 = vset.pattern.permute.xlu0 6
    %635 = vperm.xlu0 %634, %v12
    %v636 = vpop.permute.xlu0 %635
    %v638 = vadd.f32 %v633, %v636
    %v639 = vmul.f32 %v638, 0.5
    %v640 = vtanh.pop %v639
    %v641 = vmul.f32 %v640, 0.5
    %v642 = vadd.f32 %v641, 0.5
    %vm643 = vcmask 57344
    %644 = vst.msk [vmem:[#allocation2] sm:$0x1] %vm643, %v642
    // Predicated region
    $region10: #{tpu_custom_call.1} parent=1 // pred_check
      _
    $region11: #{tpu_custom_call.1} parent=1 // pred_check_branch
      %646 = sbr.rel (0) target = $region13
    $region12: #{tpu_custom_call.1} parent=1 // pred_region
      %648 = vsyncadd [#allocation3], 0
      %s650 = sshll.u32 [#allocation2], 4
      %s651 = int_to_ptr.vmem [resolvable:$true] %s650
      %s652 = sshll.u32 %s2, 4
      %s653 = int_to_ptr.hbm [resolvable:$true] %s652
      %655 = dma.vmem_to_hbm [thread:$0]  %s651, 16, %s653, [#allocation3]
    $region13: #{tpu_custom_call.1} parent=1 // pred_fallthru
      _
    // Predicated region
    $region14: #{tpu_custom_call.1} parent=1 // pred_check
      _
    $region15: #{tpu_custom_call.1} parent=1 // pred_check_branch
      %657 = sbr.rel (0) target = $region17
    $region16: #{tpu_custom_call.1} parent=1 // pred_region
      %659 = dma.done [#allocation3], 16
    $region17: #{tpu_custom_call.1} parent=1 // pred_fallthru
      _
    %660 = vsyncpa [#allocation3], 1

</llo_original>
